<compile_context>
chip_gen: v7x
topology: tpu7x:2x2x1
jax: 0.10.0
libtpu: 0.0.40
codegen_flags: <defaults>
</compile_context>

<pallas_src>
import functools

import jax
import jax.numpy as jnp
from jax.experimental import pallas as pl
from jax.experimental.pallas import tpu as pltpu


_LEAKY_SLOPE = 0.2
_VMEM_HEADROOM = 16 << 20  # compiler internal scratch / double-buffer slack


def _vmem_capacity_bytes():
    """Best-effort physical VMEM capacity; conservative (64 MiB) if unknown."""
    try:
        info = pltpu.get_tpu_info()
        cap = int(getattr(info, "vmem_capacity_bytes"))
        if cap > 0:
            return cap
    except Exception:
        pass
    try:
        kind = jax.devices()[0].device_kind.lower()
        if ("v5" in kind) or ("v6" in kind):
            return 128 << 20
        if "v4" in kind:
            return 128 << 20
    except Exception:
        pass
    return 64 << 20  # v7x-safe default


_VMEM_CAP = _vmem_capacity_bytes()
if _VMEM_CAP >= (96 << 20):            # v5e / v6e: 128 MiB physical VMEM
    _FUSED_BUDGET = 90 << 20
    _FUSED_LIMIT_CAP = 96 << 20
    _WEIGHT_TILE_BUDGET = 32 << 20
    _FALLBACK_LIMIT_CAP = 96 << 20
else:                                   # v7x (64 MiB) or unknown
    _FUSED_BUDGET = 40 << 20
    _FUSED_LIMIT_CAP = 48 << 20
    _WEIGHT_TILE_BUDGET = 12 << 20
    _FALLBACK_LIMIT_CAP = 48 << 20


# -----------------------------------------------------------------------------
# Fused whole-MLP kernel (optionally gridded over the batch/M axis).
# -----------------------------------------------------------------------------
def _fused_mlp_kernel(x_ref, *refs, num_hidden, negative_slope):
    """refs = (w0, b0, w1, b1, ..., w_last_row, b_last, o_ref).

    Hidden layers: MXU matmul (bf16 weights, f32 accumulate) + bias + LeakyReLU.
    Final Linear(H, 1): VPU multiply + cross-lane reduction (no 1-lane matmul).
    """
    o_ref = refs[-1]
    p = refs[:-1]

    x = x_ref[...]  # (m, F) bf16 (input pre-cast in the wrapper)
    for i in range(num_hidden):
        w = p[2 * i][...]          # (in, out) bf16
        b = p[2 * i + 1][...]      # (1, out)  f32
        h = jnp.dot(x.astype(w.dtype), w, preferred_element_type=jnp.float32)
        h = h + b.astype(jnp.float32)
        x = jnp.where(h >= 0.0, h, negative_slope * h)  # f32

    w_last = p[2 * num_hidden][...].astype(jnp.float32)       # (1, H)
    b_last = p[2 * num_hidden + 1][...].astype(jnp.float32)   # (1, 1)
    out = jnp.sum(x * w_last, axis=-1, keepdims=True) + b_last
    o_ref[...] = out.astype(o_ref.dtype)


def fused_mlp_pallas(x, hidden_params, w_last_row, b_last, *, negative_slope,
                     vmem_limit_bytes, block_m=None):
    Mp, F = x.shape
    args = [x]
    for w, b in hidden_params:
        args += [w, b]
    args += [w_last_row, b_last]

    kernel = functools.partial(
        _fused_mlp_kernel,
        num_hidden=len(hidden_params),
        negative_slope=negative_slope,
    )

    if block_m is None or block_m >= Mp:
        # Single invocation, no grid: everything VMEM-resident, one launch.
        return pl.pallas_call(
            kernel,
            out_shape=jax.ShapeDtypeStruct((Mp, 1), jnp.float32),
            compiler_params=pltpu.CompilerParams(
                vmem_limit_bytes=int(vmem_limit_bytes)),
        )(*args)

    # Large-batch path: grid over M, weights stay resident (constant index_map).
    assert Mp % block_m == 0
    in_specs = [pl.BlockSpec((block_m, F), lambda i: (i, 0))]
    for w, b in hidden_params:
        in_specs += [pl.BlockSpec(w.shape, lambda i: (0, 0)),
                     pl.BlockSpec(b.shape, lambda i: (0, 0))]
    in_specs += [pl.BlockSpec(w_last_row.shape, lambda i: (0, 0)),
                 pl.BlockSpec(b_last.shape, lambda i: (0, 0))]
    return pl.pallas_call(
        kernel,
        out_shape=jax.ShapeDtypeStruct((Mp, 1), jnp.float32),
        grid=(Mp // block_m,),
        in_specs=in_specs,
        out_specs=pl.BlockSpec((block_m, 1), lambda i: (i, 0)),
        compiler_params=pltpu.CompilerParams(
            dimension_semantics=("parallel",),
            vmem_limit_bytes=int(vmem_limit_bytes)),
    )(*args)


# -----------------------------------------------------------------------------
# Fallback path (very large hidden_poseall): per-layer whole-K, N-tiled linear.
# -----------------------------------------------------------------------------
def _linear_kernel(x_ref, w_ref, b_ref, o_ref, *, negative_slope):
    h = jnp.dot(x_ref[...].astype(w_ref.dtype), w_ref[...],
                preferred_element_type=jnp.float32)
    h = h + b_ref[...].astype(jnp.float32)
    if negative_slope is not None:
        h = jnp.where(h >= 0.0, h, negative_slope * h)
    o_ref[...] = h.astype(o_ref.dtype)


def _last_linear_reduce_kernel(x_ref, w_ref, b_ref, wl_ref, bl_ref, o_ref,
                               acc_ref, *, negative_slope):
    """Last hidden Linear + LeakyReLU with the final (1,H) reduce folded in.

    Accumulates sum_j(h_tile * w_last_tile) into an (M,1) VMEM scratch across
    the N-tile grid and writes (acc + b_last) at the last step.
    """
    j = pl.program_id(0)

    @pl.when(j == 0)
    def _():
        acc_ref[...] = jnp.zeros_like(acc_ref)

    h = jnp.dot(x_ref[...].astype(w_ref.dtype), w_ref[...],
                preferred_element_type=jnp.float32)
    h = h + b_ref[...].astype(jnp.float32)
    h = jnp.where(h >= 0.0, h, negative_slope * h)
    acc_ref[...] += jnp.sum(h * wl_ref[...].astype(jnp.float32),
                            axis=-1, keepdims=True)

    @pl.when(j == pl.num_programs(0) - 1)
    def _():
        o_ref[...] = (acc_ref[...] + bl_ref[...].astype(jnp.float32)
                      ).astype(o_ref.dtype)


def _pick_tn(K, N, w_itemsize, weight_tile_budget):
    # Largest lane-aligned N tile whose double-buffered weight tile stays small.
    for tn in (1024, 512, 256, 128):
        if N % tn == 0 and K * tn * w_itemsize * 2 <= weight_tile_budget:
            return tn
    return N  # small / oddly-sized layer: take the whole output width


def linear_pallas(x, w, b, *, negative_slope, out_dtype=jnp.bfloat16):
    """y = leaky_relu(x @ w + b); full K in one step, output tiled over N."""
    M, K = x.shape
    Kw, N = w.shape
    assert K == Kw
    tn = _pick_tn(K, N, w.dtype.itemsize, _WEIGHT_TILE_BUDGET)
    grid_n = pl.cdiv(N, tn)

    need = (M * K * x.dtype.itemsize) * 2 + (K * tn * w.dtype.itemsize) * 2 \
        + (tn * 4) * 2 + (M * tn * jnp.dtype(out_dtype).itemsize) * 2 \
        + M * tn * 4
    vmem_limit = int(min(max(2 * need, 32 << 20), _FALLBACK_LIMIT_CAP))

    kernel = functools.partial(_linear_kernel, negative_slope=negative_slope)
    return pl.pallas_call(
        kernel,
        out_shape=jax.ShapeDtypeStruct((M, N), out_dtype),
        grid=(grid_n,),
        in_specs=[
            pl.BlockSpec((M, K), lambda j: (0, 0)),   # whole activation
            pl.BlockSpec((K, tn), lambda j: (0, j)),  # weight column block
            pl.BlockSpec((1, tn), lambda j: (0, j)),  # bias block
        ],
        out_specs=pl.BlockSpec((M, tn), lambda j: (0, j)),
        compiler_params=pltpu.CompilerParams(
            dimension_semantics=("parallel",) if grid_n > 1 else ("arbitrary",),
            vmem_limit_bytes=vmem_limit,
        ),
    )(x, w, b)


def last_linear_reduce_pallas(x, w, b, w_last_row, b_last, *, negative_slope):
    """Last hidden layer + final Linear(H,1) fused into one pallas_call."""
    M, K = x.shape
    Kw, N = w.shape
    assert K == Kw and w_last_row.shape == (1, N)
    tn = _pick_tn(K, N, w.dtype.itemsize, _WEIGHT_TILE_BUDGET)
    grid_n = pl.cdiv(N, tn)

    need = (M * K * x.dtype.itemsize) * 2 + (K * tn * w.dtype.itemsize) * 2 \
        + (tn * 4) * 2 + (tn * w_last_row.dtype.itemsize) * 2 \
        + M * tn * 4 + 2 * M * 4 + 8
    vmem_limit = int(min(max(2 * need, 32 << 20), _FALLBACK_LIMIT_CAP))

    kernel = functools.partial(_last_linear_reduce_kernel,
                               negative_slope=negative_slope)
    return pl.pallas_call(
        kernel,
        out_shape=jax.ShapeDtypeStruct((M, 1), jnp.float32),
        grid=(grid_n,),
        in_specs=[
            pl.BlockSpec((M, K), lambda j: (0, 0)),   # whole activation
            pl.BlockSpec((K, tn), lambda j: (0, j)),  # weight column block
            pl.BlockSpec((1, tn), lambda j: (0, j)),  # bias block
            pl.BlockSpec((1, tn), lambda j: (0, j)),  # w_last row block
            pl.BlockSpec((1, 1), lambda j: (0, 0)),   # b_last
        ],
        out_specs=pl.BlockSpec((M, 1), lambda j: (0, 0)),  # accumulator output
        scratch_shapes=[pltpu.VMEM((M, 1), jnp.float32)],
        compiler_params=pltpu.CompilerParams(
            dimension_semantics=("arbitrary",),   # reduction over N-tiles
            vmem_limit_bytes=vmem_limit,
        ),
    )(x, w, b, w_last_row, b_last)


# -----------------------------------------------------------------------------
# Module wrapper.
# -----------------------------------------------------------------------------
class PoseAllDiscriminatorPallas:
    def __init__(self, num_joints, hidden_feature=32, hidden_poseall=1024,
                 num_layers=2, key=None, param_dtype=jnp.bfloat16):
        self.num_joints = num_joints
        self.hidden_feature = hidden_feature
        self.hidden_poseall = hidden_poseall
        self.num_layers = num_layers
        self.in_dim = hidden_feature * num_joints

        if key is None:
            key = jax.random.PRNGKey(0)

        dims = [self.in_dim] + [hidden_poseall] * num_layers
        self.hidden_params = []
        for i in range(num_layers):
            key, wk, bk = jax.random.split(key, 3)
            bound = 1.0 / float(dims[i]) ** 0.5
            # Stored as (in, out): y = x @ W + b (same math as torch's x @ W.T + b).
            w = jax.random.uniform(wk, (dims[i], dims[i + 1]), minval=-bound,
                                   maxval=bound, dtype=jnp.float32).astype(param_dtype)
            b = jax.random.uniform(bk, (1, dims[i + 1]), minval=-bound,
                                   maxval=bound, dtype=jnp.float32)
            self.hidden_params.append((w, b))

        # Final Linear(H, 1): stored pre-transposed as a (1, H) row so kernels
        # fold it into a lane-wise multiply + reduction.
        key, wk, bk = jax.random.split(key, 3)
        bound = 1.0 / float(hidden_poseall) ** 0.5
        self.w_last = jax.random.uniform(wk, (1, hidden_poseall), minval=-bound,
                                         maxval=bound, dtype=jnp.float32).astype(param_dtype)
        self.b_last = jax.random.uniform(bk, (1, 1), minval=-bound,
                                         maxval=bound, dtype=jnp.float32)

    def _fused_vmem_estimate(self, rows, *, gridded):
        in_b = rows * self.in_dim * 2        # bf16 input block
        out_b = rows * 4
        wbytes = 0
        widths = []
        for w, b in self.hidden_params:
            wbytes += w.size * w.dtype.itemsize + b.size * b.dtype.itemsize
            widths.append(w.shape[1])
        wbytes += self.w_last.size * self.w_last.dtype.itemsize
        wbytes += self.b_last.size * self.b_last.dtype.itemsize
        act = 3 * rows * max(widths) * 4     # f32 activation temporaries
        # When gridded, Pallas pipelines/double-buffers the input blocks; keep a
        # x2 factor on all streamed operands to stay safe.
        mult = 2 if gridded else 1
        return mult * (in_b + out_b + wbytes) + act

    def __call__(self, comm_features, *, force_per_layer=False, block_m=None):
        B = comm_features.shape[0]
        # == .view(B, -1); cast to bf16 once here (hoisted out of the kernel).
        x = comm_features.reshape(B, -1).astype(jnp.bfloat16)

        # Auto-enable an M grid only for genuinely large batches (dual-TC on
        # v7x, DMA/MXU overlap); no benefit at B ~ 8.
        if block_m is None and B >= 512:
            block_m = 256

        if block_m is not None:
            Mp = ((B + block_m - 1) // block_m) * block_m
        else:
            Mp = ((B + 7) // 8) * 8
        if Mp != B:
            x = jnp.pad(x, ((0, Mp - B), (0, 0)))
        if block_m is not None and block_m >= Mp:
            block_m = None

        rows = block_m if block_m is not None else Mp
        est = self._fused_vmem_estimate(rows, gridded=block_m is not None)

        if (not force_per_layer) and est + _VMEM_HEADROOM <= _FUSED_BUDGET:
            # Fused path: activations never round-trip through HBM.
            vmem_limit = min(max(est + _VMEM_HEADROOM, 32 << 20), _FUSED_LIMIT_CAP)
            out = fused_mlp_pallas(
                x, self.hidden_params, self.w_last, self.b_last,
                negative_slope=_LEAKY_SLOPE, vmem_limit_bytes=vmem_limit,
                block_m=block_m)
        else:
            # Huge-H fallback: per-layer whole-K matmuls, bf16 activations
            # between calls, final (1,H) reduce folded into the last layer.
            # TODO(synk): stream weights via pltpu.emit_pipeline inside a single
            # pallas_call to also remove the remaining per-layer launches.
            h = x
            for w, b in self.hidden_params[:-1]:
                h = linear_pallas(h, w, b, negative_slope=_LEAKY_SLOPE,
                                  out_dtype=jnp.bfloat16)
            w_l, b_l = self.hidden_params[-1]
            out = last_linear_reduce_pallas(
                h, w_l, b_l, self.w_last, self.b_last,
                negative_slope=_LEAKY_SLOPE)

        return out[:B]  # (B, 1)


# -----------------------------------------------------------------------------
# Pure-JAX reference (mirrors the kernel math exactly, including bf16 casts).
# -----------------------------------------------------------------------------
def _reference_forward(model, comm_features):
    B = comm_features.shape[0]
    x = comm_features.reshape(B, -1).astype(jnp.bfloat16)
    for w, b in model.hidden_params:
        h = jnp.dot(x.astype(w.dtype), w, preferred_element_type=jnp.float32) + b
        x = jnp.where(h >= 0.0, h, _LEAKY_SLOPE * h)
    out = jnp.sum(x * model.w_last.astype(jnp.float32), axis=-1, keepdims=True)
    return out + model.b_last


if __name__ == "__main__":
    key = jax.random.PRNGKey(0)
    k_in, k_in2, k_model = jax.random.split(key, 3)

    # Small shapes consistent with the module.
    batch, num_joints, hidden_feature = 4, 8, 32
    hidden_poseall, num_layers = 256, 2

    model = PoseAllDiscriminatorPallas(
        num_joints=num_joints,
        hidden_feature=hidden_feature,
        hidden_poseall=hidden_poseall,
        num_layers=num_layers,
        key=k_model,
    )

    comm_features = jax.random.normal(
        k_in, (batch, num_joints, hidden_feature), dtype=jnp.float32)
    ref = _reference_forward(model, comm_features)

    # 1) Primary fused path (grid-less).
    out_fused = jax.block_until_ready(model(comm_features))
    assert out_fused.shape == (batch, 1), out_fused.shape
    assert jnp.allclose(out_fused, ref, atol=2e-3, rtol=2e-3), (out_fused, ref)

    # 2) Fallback path (per-layer linears + fused final reduce), forced.
    out_tiled = jax.block_until_ready(model(comm_features, force_per_layer=True))
    assert out_tiled.shape == (batch, 1), out_tiled.shape
    assert jnp.allclose(out_tiled, ref, atol=2e-3, rtol=2e-3), (out_tiled, ref)

    # 3) Fused path with an M grid (large-batch / dual-TC configuration),
    #    exercised here with a small block to validate the gridded codepath.
    batch_big = 24
    comm_big = jax.random.normal(
        k_in2, (batch_big, num_joints, hidden_feature), dtype=jnp.float32)
    ref_big = _reference_forward(model, comm_big)
    out_grid = jax.block_until_ready(model(comm_big, block_m=8))
    assert out_grid.shape == (batch_big, 1), out_grid.shape
    assert jnp.allclose(out_grid, ref_big, atol=2e-3, rtol=2e-3), (out_grid, ref_big)

    print("KERNEL_OK")
</pallas_src>

<mosaic_0001>
module attributes {stable_mosaic.version = 11 : i64} {
  func.func @_fused_mlp_kernel(%arg0: memref<8x256xbf16, #tpu.memory_space<vmem>>, %arg1: memref<256x256xbf16, #tpu.memory_space<vmem>>, %arg2: memref<1x256xf32, #tpu.memory_space<vmem>>, %arg3: memref<256x256xbf16, #tpu.memory_space<vmem>>, %arg4: memref<1x256xf32, #tpu.memory_space<vmem>>, %arg5: memref<1x256xbf16, #tpu.memory_space<vmem>>, %arg6: memref<1x1xf32, #tpu.memory_space<vmem>>, %arg7: memref<8x1xf32, #tpu.memory_space<vmem>>) attributes {dimension_semantics = [], scalar_prefetch = 0 : i64, scratch_operands = 0 : i64, tpu.core_type = #tpu.core_type<tc>} {
    %c0 = arith.constant 0 : index
    %c0_0 = arith.constant 0 : index
    %0 = vector.load %arg0[%c0, %c0_0] : memref<8x256xbf16, #tpu.memory_space<vmem>>, vector<8x256xbf16>
    %c0_1 = arith.constant 0 : index
    %c0_2 = arith.constant 0 : index
    %1 = vector.load %arg1[%c0_1, %c0_2] : memref<256x256xbf16, #tpu.memory_space<vmem>>, vector<256x256xbf16>
    %c0_3 = arith.constant 0 : index
    %c0_4 = arith.constant 0 : index
    %2 = vector.load %arg2[%c0_3, %c0_4] : memref<1x256xf32, #tpu.memory_space<vmem>>, vector<1x256xf32>
    %cst = arith.constant dense<0.000000e+00> : vector<8x256xf32>
    %3 = tpu.matmul %0, %1, %cst {dimension_numbers = #tpu.dot_dimension_numbers<[1], [0], [0], [1], [0, 0, 1, 1], [], []>} : vector<8x256xbf16>, vector<256x256xbf16>, vector<8x256xf32> -> vector<8x256xf32>
    %4 = vector.broadcast %2 : vector<1x256xf32> to vector<8x256xf32>
    %5 = arith.addf %3, %4 : vector<8x256xf32>
    %cst_5 = arith.constant 0.000000e+00 : f32
    %6 = vector.broadcast %cst_5 : f32 to vector<8x256xf32>
    %7 = arith.cmpf oge, %5, %6 : vector<8x256xf32>
    %cst_6 = arith.constant 2.000000e-01 : f32
    %8 = vector.broadcast %cst_6 : f32 to vector<8x256xf32>
    %9 = arith.mulf %8, %5 : vector<8x256xf32>
    %10 = arith.select %7, %5, %9 : vector<8x256xi1>, vector<8x256xf32>
    %c0_7 = arith.constant 0 : index
    %c0_8 = arith.constant 0 : index
    %11 = vector.load %arg3[%c0_7, %c0_8] : memref<256x256xbf16, #tpu.memory_space<vmem>>, vector<256x256xbf16>
    %c0_9 = arith.constant 0 : index
    %c0_10 = arith.constant 0 : index
    %12 = vector.load %arg4[%c0_9, %c0_10] : memref<1x256xf32, #tpu.memory_space<vmem>>, vector<1x256xf32>
    %13 = arith.truncf %10 : vector<8x256xf32> to vector<8x256xbf16>
    %cst_11 = arith.constant dense<0.000000e+00> : vector<8x256xf32>
    %14 = tpu.matmul %13, %11, %cst_11 {dimension_numbers = #tpu.dot_dimension_numbers<[1], [0], [0], [1], [0, 0, 1, 1], [], []>} : vector<8x256xbf16>, vector<256x256xbf16>, vector<8x256xf32> -> vector<8x256xf32>
    %15 = vector.broadcast %12 : vector<1x256xf32> to vector<8x256xf32>
    %16 = arith.addf %14, %15 : vector<8x256xf32>
    %cst_12 = arith.constant 0.000000e+00 : f32
    %17 = vector.broadcast %cst_12 : f32 to vector<8x256xf32>
    %18 = arith.cmpf oge, %16, %17 : vector<8x256xf32>
    %cst_13 = arith.constant 2.000000e-01 : f32
    %19 = vector.broadcast %cst_13 : f32 to vector<8x256xf32>
    %20 = arith.mulf %19, %16 : vector<8x256xf32>
    %21 = arith.select %18, %16, %20 : vector<8x256xi1>, vector<8x256xf32>
    %c0_14 = arith.constant 0 : index
    %c0_15 = arith.constant 0 : index
    %22 = vector.load %arg5[%c0_14, %c0_15] : memref<1x256xbf16, #tpu.memory_space<vmem>>, vector<1x256xbf16>
    %23 = arith.extf %22 : vector<1x256xbf16> to vector<1x256xf32>
    %c0_16 = arith.constant 0 : index
    %c0_17 = arith.constant 0 : index
    %24 = vector.load %arg6[%c0_16, %c0_17] : memref<1x1xf32, #tpu.memory_space<vmem>>, vector<1x1xf32>
    %25 = vector.broadcast %23 : vector<1x256xf32> to vector<8x256xf32>
    %26 = arith.mulf %21, %25 : vector<8x256xf32>
    %cst_18 = arith.constant dense<0.000000e+00> : vector<8xf32>
    %27 = vector.multi_reduction <add>, %26, %cst_18 [1] : vector<8x256xf32> to vector<8xf32>
    %28 = vector.shape_cast %27 : vector<8xf32> to vector<8x1xf32>
    %29 = vector.broadcast %24 : vector<1x1xf32> to vector<8x1xf32>
    %30 = arith.addf %28, %29 : vector<8x1xf32>
    %c0_19 = arith.constant 0 : index
    %c0_20 = arith.constant 0 : index
    %31 = vector.load %arg7[%c0_19, %c0_20] : memref<8x1xf32, #tpu.memory_space<vmem>>, vector<8x1xf32>
    tpu.vector_store %arg7[%c0_19, %c0_20], %30 {strides = array<i32>} : memref<8x1xf32, #tpu.memory_space<vmem>>, vector<8x1xf32>,
    return
  }
}

</mosaic_0001>

<llo_original>
// kernel: tpu_custom_call.1
$region0: #{tpu_custom_call.1}
  #allocation0 [shape = 'u32[]', space=smem, size = 0x4, offset = 0x4, fixed_abs, tag = 'smem constant byte address 0x4 - core index']
  #allocation1 [shape = 'u32[144,128]{1,0:T(1,128)}', space=vmem, size = 0x12000, scoped, tag = 'internal scratch']
  #allocation2 [shape = 'f32[1,1]{1,0:T(1,128)S(1)}', space=vmem, size = 0x200, scoped, tag = 'scoped memory for tpu_custom_call.1']
  %s0 = inlined_call_operand.hbm [shape: bf16[8,256], index: 0, kind: input, shape index: {}]
  %s1 = inlined_call_operand.hbm [shape: bf16[256,256], index: 1, kind: input, shape index: {}]
  %s2 = inlined_call_operand.vmem [shape: f32[1,256], index: 2, kind: input, shape index: {}]
  %s3 = inlined_call_operand.hbm [shape: bf16[256,256], index: 3, kind: input, shape index: {}]
  %s4 = inlined_call_operand.vmem [shape: f32[1,256], index: 4, kind: input, shape index: {}]
  %s5 = inlined_call_operand.vmem [shape: bf16[1,256], index: 5, kind: input, shape index: {}]
  %s6 = inlined_call_operand.<no memory space> [shape: f32[1,1], index: 6, kind: input, shape index: {}]
  %s7 = inlined_call_operand.vmem [shape: f32[8,1], index: 7, kind: output, shape index: {}]
  %s8 = sld [smem:[#allocation0]]
  $region50: #{tpu_custom_call.1} parent=0
    _
  %s10 = ssub.s32 1, %s8
  %s11 = scalar_select 0, %s10, %s8
  %v12 = vstv %s6
  %13 = vst [vmem:[#allocation2] sm:$0x1] %v12
  $region1: #{tpu_custom_call.1} parent=0
    #allocation3 [shape = 'u8[4096]{0}', space=vmem, size = 0x1000, scoped, tag = 'input window, operand 0, single buffered']
    #allocation4 [shape = 's32[1]{0}', space=sflag, size = 0x4, scoped, tag = 'scoped memory for tpu_custom_call.1']
    #allocation5 [shape = 'u8[131072]{0}', space=vmem, size = 0x20000, scoped, tag = 'input window, operand 1, single buffered']
    #allocation6 [shape = 's32[1]{0}', space=sflag, size = 0x4, scoped, tag = 'scoped memory for tpu_custom_call.1']
    #allocation7 [shape = 'u8[131072]{0}', space=vmem, size = 0x20000, scoped, tag = 'input window, operand 3, single buffered']
    %14 = vsyncpa [#allocation4], 0
    %15 = vsyncpa [#allocation6], 0
    // Predicated region
    $region2: #{tpu_custom_call.1} parent=1 // pred_check
      _
    $region3: #{tpu_custom_call.1} parent=1 // pred_check_branch
      %17 = sbr.rel (0) target = $region5
    $region4: #{tpu_custom_call.1} parent=1 // pred_region
      %s19 = ssub.s32 128, 128
      %20 = vsyncadd [#allocation4], %s19
      %s22 = sshll.u32 [#allocation3], 4
      %s23 = int_to_ptr.vmem [resolvable:$true] %s22
      %25 = dma.hbm_to_vmem [thread:$0]  %s0, 128, %s23, [#allocation4]
    $region5: #{tpu_custom_call.1} parent=1 // pred_fallthru
      _
    // Predicated region
    $region6: #{tpu_custom_call.1} parent=1 // pred_check
      _
    $region7: #{tpu_custom_call.1} parent=1 // pred_check_branch
      %27 = sbr.rel (0) target = $region9
    $region8: #{tpu_custom_call.1} parent=1 // pred_region
      %s29 = ssub.s32 4096, 4096
      %30 = vsyncadd [#allocation6], %s29
      %s31 = sshll.u32 [#allocation5], 4
      %s32 = int_to_ptr.vmem [resolvable:$true] %s31
      %37 = dma.hbm_to_vmem [thread:$0]  %s1, 4096, %s32, [#allocation6], 128, 128, 8
    $region9: #{tpu_custom_call.1} parent=1 // pred_fallthru
      _
    // Predicated region
    $region10: #{tpu_custom_call.1} parent=1 // pred_check
      _
    $region11: #{tpu_custom_call.1} parent=1 // pred_check_branch
      %39 = sbr.rel (0) target = $region13
    $region12: #{tpu_custom_call.1} parent=1 // pred_region
      _
    $region13: #{tpu_custom_call.1} parent=1 // pred_fallthru
      _
    // Predicated region
    $region14: #{tpu_custom_call.1} parent=1 // pred_check
      _
    $region15: #{tpu_custom_call.1} parent=1 // pred_check_branch
      %41 = sbr.rel (0) target = $region17
    $region16: #{tpu_custom_call.1} parent=1 // pred_region
      %s43 = ssub.s32 4096, 4096
      %44 = vsyncadd [#allocation6], %s43
      %s45 = sshll.u32 [#allocation7], 4
      %s46 = int_to_ptr.vmem [resolvable:$true] %s45
      %51 = dma.hbm_to_vmem [thread:$0]  %s3, 4096, %s46, [#allocation6], 128, 128, 8
    $region17: #{tpu_custom_call.1} parent=1 // pred_fallthru
      _
    // Predicated region
    $region18: #{tpu_custom_call.1} parent=1 // pred_check
      _
    $region19: #{tpu_custom_call.1} parent=1 // pred_check_branch
      %53 = sbr.rel (0) target = $region21
    $region20: #{tpu_custom_call.1} parent=1 // pred_region
      _
    $region21: #{tpu_custom_call.1} parent=1 // pred_fallthru
      _
    // Predicated region
    $region22: #{tpu_custom_call.1} parent=1 // pred_check
      _
    $region23: #{tpu_custom_call.1} parent=1 // pred_check_branch
      %55 = sbr.rel (0) target = $region25
    $region24: #{tpu_custom_call.1} parent=1 // pred_region
      _
    $region25: #{tpu_custom_call.1} parent=1 // pred_fallthru
      _
    // Predicated region
    $region26: #{tpu_custom_call.1} parent=1 // pred_check
      _
    $region27: #{tpu_custom_call.1} parent=1 // pred_check_branch
      %57 = sbr.rel (0) target = $region29
    $region28: #{tpu_custom_call.1} parent=1 // pred_region
      _
    $region29: #{tpu_custom_call.1} parent=1 // pred_fallthru
      _
    // Predicated region
    $region30: #{tpu_custom_call.1} parent=1 // pred_check
      _
    $region31: #{tpu_custom_call.1} parent=1 // pred_check_branch
      %59 = sbr.rel (0) target = $region33
    $region32: #{tpu_custom_call.1} parent=1 // pred_region
      %60 = dma.done [#allocation4], 128
    $region33: #{tpu_custom_call.1} parent=1 // pred_fallthru
      _
    // Predicated region
    $region34: #{tpu_custom_call.1} parent=1 // pred_check
      _
    $region35: #{tpu_custom_call.1} parent=1 // pred_check_branch
      %62 = sbr.rel (0) target = $region37
    $region36: #{tpu_custom_call.1} parent=1 // pred_region
      %63 = dma.done [#allocation6], 4096
    $region37: #{tpu_custom_call.1} parent=1 // pred_fallthru
      _
    // Predicated region
    $region38: #{tpu_custom_call.1} parent=1 // pred_check
      _
    $region39: #{tpu_custom_call.1} parent=1 // pred_check_branch
      %65 = sbr.rel (0) target = $region41
    $region40: #{tpu_custom_call.1} parent=1 // pred_region
      %66 = dma.done [#allocation6], 4096
    $region41: #{tpu_custom_call.1} parent=1 // pred_fallthru
      _
    %v67 = vld [vmem:[#allocation3] sm:$0xff]
    %v68 = vld [vmem:[#allocation5] sm:$0xff]
    %v69 = vld [vmem:[#allocation5 + $0x8] sm:$0xff]
    %v70 = vld [vmem:[#allocation5 + $0x10] sm:$0xff]
    %v71 = vld [vmem:[#allocation5 + $0x18] sm:$0xff]
    %v72 = vld [vmem:[#allocation5 + $0x20] sm:$0xff]
    %v73 = vld [vmem:[#allocation5 + $0x28] sm:$0xff]
    %v74 = vld [vmem:[#allocation5 + $0x30] sm:$0xff]
    %v75 = vld [vmem:[#allocation5 + $0x38] sm:$0xff]
    %v76 = vld [vmem:[#allocation5 + $0x40] sm:$0xff]
    %v77 = vld [vmem:[#allocation5 + $0x48] sm:$0xff]
    %v78 = vld [vmem:[#allocation5 + $0x50] sm:$0xff]
    %v79 = vld [vmem:[#allocation5 + $0x58] sm:$0xff]
    %v80 = vld [vmem:[#allocation5 + $0x60] sm:$0xff]
    %v81 = vld [vmem:[#allocation5 + $0x68] sm:$0xff]
    %v82 = vld [vmem:[#allocation5 + $0x70] sm:$0xff]
    %v83 = vld [vmem:[#allocation5 + $0x78] sm:$0xff]
    %v84 = vld [vmem:[#allocation5 + $0x80] sm:$0xff]
    %v85 = vld [vmem:[#allocation5 + $0x88] sm:$0xff]
    %v86 = vld [vmem:[#allocation5 + $0x90] sm:$0xff]
    %v87 = vld [vmem:[#allocation5 + $0x98] sm:$0xff]
    %v88 = vld [vmem:[#allocation5 + $0xa0] sm:$0xff]
    %v89 = vld [vmem:[#allocation5 + $0xa8] sm:$0xff]
    %v90 = vld [vmem:[#allocation5 + $0xb0] sm:$0xff]
    %v91 = vld [vmem:[#allocation5 + $0xb8] sm:$0xff]
    %v92 = vld [vmem:[#allocation5 + $0xc0] sm:$0xff]
    %v93 = vld [vmem:[#allocation5 + $0xc8] sm:$0xff]
    %v94 = vld [vmem:[#allocation5 + $0xd0] sm:$0xff]
    %v95 = vld [vmem:[#allocation5 + $0xd8] sm:$0xff]
    %v96 = vld [vmem:[#allocation5 + $0xe0] sm:$0xff]
    %v97 = vld [vmem:[#allocation5 + $0xe8] sm:$0xff]
    %v98 = vld [vmem:[#allocation5 + $0xf0] sm:$0xff]
    %v99 = vld [vmem:[#allocation5 + $0xf8] sm:$0xff]
    %v100 = vld [vmem:[%s2] sm:$0x3]
    %v102 = vlaneseq
    %v103 = vshrl.u32 %v102, 7
    %v104 = vsub.s32 0, %v103
    %v105 = vrot.slane %v100, %v104
    %v106 = vlaneseq
    %v107 = vshrl.u32 %v106, 7
    %v108 = vsub.s32 1, %v107
    %v109 = vrot.slane %v100, %v108
    %v113 = vunpack.c.l.b16 %v67
    %v114 = vunpack.c.h.b16 %v67
    %v115 = vpack.c.b16 %v113, %v113
    %v116 = vpack.c.b16 %v114, %v114
    %v151 = vunpack.c.l.b16 %v68
    %v152 = vunpack.c.h.b16 %v68
    %v153 = vunpack.c.l.b16 %v69
    %v154 = vunpack.c.h.b16 %v69
    %v155 = vunpack.c.l.b16 %v70
    %v156 = vunpack.c.h.b16 %v70
    %v157 = vunpack.c.l.b16 %v71
    %v158 = vunpack.c.h.b16 %v71
    %v159 = vunpack.c.l.b16 %v72
    %v160 = vunpack.c.h.b16 %v72
    %v161 = vunpack.c.l.b16 %v73
    %v162 = vunpack.c.h.b16 %v73
    %v163 = vunpack.c.l.b16 %v74
    %v164 = vunpack.c.h.b16 %v74
    %v165 = vunpack.c.l.b16 %v75
    %v166 = vunpack.c.h.b16 %v75
    %v167 = vunpack.c.l.b16 %v76
    %v168 = vunpack.c.h.b16 %v76
    %v169 = vunpack.c.l.b16 %v77
    %v170 = vunpack.c.h.b16 %v77
    %v171 = vunpack.c.l.b16 %v78
    %v172 = vunpack.c.h.b16 %v78
    %v173 = vunpack.c.l.b16 %v79
    %v174 = vunpack.c.h.b16 %v79
    %v175 = vunpack.c.l.b16 %v80
    %v176 = vunpack.c.h.b16 %v80
    %v177 = vunpack.c.l.b16 %v81
    %v178 = vunpack.c.h.b16 %v81
    %v179 = vunpack.c.l.b16 %v82
    %v180 = vunpack.c.h.b16 %v82
    %v181 = vunpack.c.l.b16 %v83
    %v182 = vunpack.c.h.b16 %v83
    %v183 = vunpack.c.l.b16 %v84
    %v184 = vunpack.c.h.b16 %v84
    %v185 = vunpack.c.l.b16 %v85
    %v186 = vunpack.c.h.b16 %v85
    %v187 = vunpack.c.l.b16 %v86
    %v188 = vunpack.c.h.b16 %v86
    %v189 = vunpack.c.l.b16 %v87
    %v190 = vunpack.c.h.b16 %v87
    %v191 = vunpack.c.l.b16 %v88
    %v192 = vunpack.c.h.b16 %v88
    %v193 = vunpack.c.l.b16 %v89
    %v194 = vunpack.c.h.b16 %v89
    %v195 = vunpack.c.l.b16 %v90
    %v196 = vunpack.c.h.b16 %v90
    %v197 = vunpack.c.l.b16 %v91
    %v198 = vunpack.c.h.b16 %v91
    %v199 = vunpack.c.l.b16 %v92
    %v200 = vunpack.c.h.b16 %v92
    %v201 = vunpack.c.l.b16 %v93
    %v202 = vunpack.c.h.b16 %v93
    %v203 = vunpack.c.l.b16 %v94
    %v204 = vunpack.c.h.b16 %v94
    %v205 = vunpack.c.l.b16 %v95
    %v206 = vunpack.c.h.b16 %v95
    %v207 = vunpack.c.l.b16 %v96
    %v208 = vunpack.c.h.b16 %v96
    %v209 = vunpack.c.l.b16 %v97
    %v210 = vunpack.c.h.b16 %v97
    %v211 = vunpack.c.l.b16 %v98
    %v212 = vunpack.c.h.b16 %v98
    %v213 = vunpack.c.l.b16 %v99
    %v214 = vunpack.c.h.b16 %v99
    %v215 = vpack.c.b16 %v153, %v151
    %v216 = vpack.c.b16 %v154, %v152
    %v217 = vpack.c.b16 %v157, %v155
    %v218 = vpack.c.b16 %v158, %v156
    %v219 = vpack.c.b16 %v161, %v159
    %v220 = vpack.c.b16 %v162, %v160
    %v221 = vpack.c.b16 %v165, %v163
    %v222 = vpack.c.b16 %v166, %v164
    %v223 = vpack.c.b16 %v169, %v167
    %v224 = vpack.c.b16 %v170, %v168
    %v225 = vpack.c.b16 %v173, %v171
    %v226 = vpack.c.b16 %v174, %v172
    %v227 = vpack.c.b16 %v177, %v175
    %v228 = vpack.c.b16 %v178, %v176
    %v229 = vpack.c.b16 %v181, %v179
    %v230 = vpack.c.b16 %v182, %v180
    %v231 = vpack.c.b16 %v185, %v183
    %v232 = vpack.c.b16 %v186, %v184
    %v233 = vpack.c.b16 %v189, %v187
    %v234 = vpack.c.b16 %v190, %v188
    %v235 = vpack.c.b16 %v193, %v191
    %v236 = vpack.c.b16 %v194, %v192
    %v237 = vpack.c.b16 %v197, %v195
    %v238 = vpack.c.b16 %v198, %v196
    %v239 = vpack.c.b16 %v201, %v199
    %v240 = vpack.c.b16 %v202, %v200
    %v241 = vpack.c.b16 %v205, %v203
    %v242 = vpack.c.b16 %v206, %v204
    %v243 = vpack.c.b16 %v209, %v207
    %v244 = vpack.c.b16 %v210, %v208
    %v245 = vpack.c.b16 %v213, %v211
    %v246 = vpack.c.b16 %v214, %v212
    %279 = vmatprep.subr.bf16.mxu0 %v216
    %280 = vmatpush1.bf16.msra.mxu0 %v215
    %281 = vmatprep.subr.bf16.mxu0 %v218
    %282 = vmatpush1.bf16.msra.mxu0 %v217
    %283 = vmatprep.subr.bf16.mxu0 %v220
    %284 = vmatpush1.bf16.msra.mxu0 %v219
    %285 = vmatprep.subr.bf16.mxu0 %v222
    %286 = vmatpush1.bf16.msra.mxu0 %v221
    %287 = vmatprep.subr.bf16.mxu0 %v224
    %288 = vmatpush1.bf16.msra.mxu0 %v223
    %289 = vmatprep.subr.bf16.mxu0 %v226
    %290 = vmatpush1.bf16.msra.mxu0 %v225
    %291 = vmatprep.subr.bf16.mxu0 %v228
    %292 = vmatpush1.bf16.msra.mxu0 %v227
    %293 = vmatprep.subr.bf16.mxu0 %v230
    %294 = vmatpush1.bf16.msra.mxu0 %v229
    %295 = vmatprep.subr.bf16.mxu0 %v232
    %296 = vmatpush1.bf16.msra.mxu0 %v231
    %297 = vmatprep.subr.bf16.mxu0 %v234
    %298 = vmatpush1.bf16.msra.mxu0 %v233
    %299 = vmatprep.subr.bf16.mxu0 %v236
    %300 = vmatpush1.bf16.msra.mxu0 %v235
    %301 = vmatprep.subr.bf16.mxu0 %v238
    %302 = vmatpush1.bf16.msra.mxu0 %v237
    %303 = vmatprep.subr.bf16.mxu0 %v240
    %304 = vmatpush1.bf16.msra.mxu0 %v239
    %305 = vmatprep.subr.bf16.mxu0 %v242
    %306 = vmatpush1.bf16.msra.mxu0 %v241
    %307 = vmatprep.subr.bf16.mxu0 %v244
    %308 = vmatpush1.bf16.msra.mxu0 %v243
    %309 = vmatprep.subr.bf16.mxu0 %v246
    %310 = vmatpush1.bf16.msra.mxu0 %v245
    %311 = vmatprep.mubr.bf16.mxu0 %v116
    %312 = vmatmul.mubr.bf16.gmra.mrb[0].mxu0 %v115
    %v313 = vpop.f32.mrb[0].mxu0
    %v314 = vadd.f32 %v105, %v313
    %v315 = vpop.f32.mrb[0].mxu0
    %v316 = vadd.f32 %v109, %v315
    %v317 = vpop.f32.mrb[0].mxu0
    %v318 = vpop.f32.mrb[0].mxu0
    %319 = vdwg.mxu0
    %vm320 = vcmp.ge.f32.partialorder %v314, 0.0
    %vm321 = vcmp.ge.f32.partialorder %v316, 0.0
    %v322 = vmul.f32 %v314, 0.2
    %v323 = vmul.f32 %v316, 0.2
    %v324 = vsel %vm320, %v314, %v322
    %v325 = vsel %vm321, %v316, %v323
    %v326 = vld [vmem:[#allocation7] sm:$0xff]
    %v327 = vld [vmem:[#allocation7 + $0x8] sm:$0xff]
    %v328 = vld [vmem:[#allocation7 + $0x10] sm:$0xff]
    %v329 = vld [vmem:[#allocation7 + $0x18] sm:$0xff]
    %v330 = vld [vmem:[#allocation7 + $0x20] sm:$0xff]
    %v331 = vld [vmem:[#allocation7 + $0x28] sm:$0xff]
    %v332 = vld [vmem:[#allocation7 + $0x30] sm:$0xff]
    %v333 = vld [vmem:[#allocation7 + $0x38] sm:$0xff]
    %v334 = vld [vmem:[#allocation7 + $0x40] sm:$0xff]
    %v335 = vld [vmem:[#allocation7 + $0x48] sm:$0xff]
    %v336 = vld [vmem:[#allocation7 + $0x50] sm:$0xff]
    %v337 = vld [vmem:[#allocation7 + $0x58] sm:$0xff]
    %v338 = vld [vmem:[#allocation7 + $0x60] sm:$0xff]
    %v339 = vld [vmem:[#allocation7 + $0x68] sm:$0xff]
    %v340 = vld [vmem:[#allocation7 + $0x70] sm:$0xff]
    %v341 = vld [vmem:[#allocation7 + $0x78] sm:$0xff]
    %v342 = vld [vmem:[#allocation7 + $0x80] sm:$0xff]
    %v343 = vld [vmem:[#allocation7 + $0x88] sm:$0xff]
    %v344 = vld [vmem:[#allocation7 + $0x90] sm:$0xff]
    %v345 = vld [vmem:[#allocation7 + $0x98] sm:$0xff]
    %v346 = vld [vmem:[#allocation7 + $0xa0] sm:$0xff]
    %v347 = vld [vmem:[#allocation7 + $0xa8] sm:$0xff]
    %v348 = vld [vmem:[#allocation7 + $0xb0] sm:$0xff]
    %v349 = vld [vmem:[#allocation7 + $0xb8] sm:$0xff]
    %v350 = vld [vmem:[#allocation7 + $0xc0] sm:$0xff]
    %v351 = vld [vmem:[#allocation7 + $0xc8] sm:$0xff]
    %v352 = vld [vmem:[#allocation7 + $0xd0] sm:$0xff]
    %v353 = vld [vmem:[#allocation7 + $0xd8] sm:$0xff]
    %v354 = vld [vmem:[#allocation7 + $0xe0] sm:$0xff]
    %v355 = vld [vmem:[#allocation7 + $0xe8] sm:$0xff]
    %v356 = vld [vmem:[#allocation7 + $0xf0] sm:$0xff]
    %v357 = vld [vmem:[#allocation7 + $0xf8] sm:$0xff]
    %v358 = vld [vmem:[%s4] sm:$0x3]
    %v359 = vpack.c.bf16 %v324, %v324
    %v360 = vpack.c.bf16 %v325, %v325
    %v362 = vlaneseq
    %v363 = vshrl.u32 %v362, 7
    %v364 = vsub.s32 0, %v363
    %v365 = vrot.slane %v358, %v364
    %v366 = vlaneseq
    %v367 = vshrl.u32 %v366, 7
    %v368 = vsub.s32 1, %v367
    %v369 = vrot.slane %v358, %v368
    %v404 = vunpack.c.l.b16 %v326
    %v405 = vunpack.c.h.b16 %v326
    %v406 = vunpack.c.l.b16 %v327
    %v407 = vunpack.c.h.b16 %v327
    %v408 = vunpack.c.l.b16 %v328
    %v409 = vunpack.c.h.b16 %v328
    %v410 = vunpack.c.l.b16 %v329
    %v411 = vunpack.c.h.b16 %v329
    %v412 = vunpack.c.l.b16 %v330
    %v413 = vunpack.c.h.b16 %v330
    %v414 = vunpack.c.l.b16 %v331
    %v415 = vunpack.c.h.b16 %v331
    %v416 = vunpack.c.l.b16 %v332
    %v417 = vunpack.c.h.b16 %v332
    %v418 = vunpack.c.l.b16 %v333
    %v419 = vunpack.c.h.b16 %v333
    %v420 = vunpack.c.l.b16 %v334
    %v421 = vunpack.c.h.b16 %v334
    %v422 = vunpack.c.l.b16 %v335
    %v423 = vunpack.c.h.b16 %v335
    %v424 = vunpack.c.l.b16 %v336
    %v425 = vunpack.c.h.b16 %v336
    %v426 = vunpack.c.l.b16 %v337
    %v427 = vunpack.c.h.b16 %v337
    %v428 = vunpack.c.l.b16 %v338
    %v429 = vunpack.c.h.b16 %v338
    %v430 = vunpack.c.l.b16 %v339
    %v431 = vunpack.c.h.b16 %v339
    %v432 = vunpack.c.l.b16 %v340
    %v433 = vunpack.c.h.b16 %v340
    %v434 = vunpack.c.l.b16 %v341
    %v435 = vunpack.c.h.b16 %v341
    %v436 = vunpack.c.l.b16 %v342
    %v437 = vunpack.c.h.b16 %v342
    %v438 = vunpack.c.l.b16 %v343
    %v439 = vunpack.c.h.b16 %v343
    %v440 = vunpack.c.l.b16 %v344
    %v441 = vunpack.c.h.b16 %v344
    %v442 = vunpack.c.l.b16 %v345
    %v443 = vunpack.c.h.b16 %v345
    %v444 = vunpack.c.l.b16 %v346
    %v445 = vunpack.c.h.b16 %v346
    %v446 = vunpack.c.l.b16 %v347
    %v447 = vunpack.c.h.b16 %v347
    %v448 = vunpack.c.l.b16 %v348
    %v449 = vunpack.c.h.b16 %v348
    %v450 = vunpack.c.l.b16 %v349
    %v451 = vunpack.c.h.b16 %v349
    %v452 = vunpack.c.l.b16 %v350
    %v453 = vunpack.c.h.b16 %v350
    %v454 = vunpack.c.l.b16 %v351
    %v455 = vunpack.c.h.b16 %v351
    %v456 = vunpack.c.l.b16 %v352
    %v457 = vunpack.c.h.b16 %v352
    %v458 = vunpack.c.l.b16 %v353
    %v459 = vunpack.c.h.b16 %v353
    %v460 = vunpack.c.l.b16 %v354
    %v461 = vunpack.c.h.b16 %v354
    %v462 = vunpack.c.l.b16 %v355
    %v463 = vunpack.c.h.b16 %v355
    %v464 = vunpack.c.l.b16 %v356
    %v465 = vunpack.c.h.b16 %v356
    %v466 = vunpack.c.l.b16 %v357
    %v467 = vunpack.c.h.b16 %v357
    %v468 = vpack.c.b16 %v406, %v404
    %v469 = vpack.c.b16 %v407, %v405
    %v470 = vpack.c.b16 %v410, %v408
    %v471 = vpack.c.b16 %v411, %v409
    %v472 = vpack.c.b16 %v414, %v412
    %v473 = vpack.c.b16 %v415, %v413
    %v474 = vpack.c.b16 %v418, %v416
    %v475 = vpack.c.b16 %v419, %v417
    %v476 = vpack.c.b16 %v422, %v420
    %v477 = vpack.c.b16 %v423, %v421
    %v478 = vpack.c.b16 %v426, %v424
    %v479 = vpack.c.b16 %v427, %v425
    %v480 = vpack.c.b16 %v430, %v428
    %v481 = vpack.c.b16 %v431, %v429
    %v482 = vpack.c.b16 %v434, %v432
    %v483 = vpack.c.b16 %v435, %v433
    %v484 = vpack.c.b16 %v438, %v436
    %v485 = vpack.c.b16 %v439, %v437
    %v486 = vpack.c.b16 %v442, %v440
    %v487 = vpack.c.b16 %v443, %v441
    %v488 = vpack.c.b16 %v446, %v444
    %v489 = vpack.c.b16 %v447, %v445
    %v490 = vpack.c.b16 %v450, %v448
    %v491 = vpack.c.b16 %v451, %v449
    %v492 = vpack.c.b16 %v454, %v452
    %v493 = vpack.c.b16 %v455, %v453
    %v494 = vpack.c.b16 %v458, %v456
    %v495 = vpack.c.b16 %v459, %v457
    %v496 = vpack.c.b16 %v462, %v460
    %v497 = vpack.c.b16 %v463, %v461
    %v498 = vpack.c.b16 %v466, %v464
    %v499 = vpack.c.b16 %v467, %v465
    %532 = vmatprep.subr.bf16.mxu0 %v469
    %533 = vmatpush1.bf16.msra.mxu0 %v468
    %534 = vmatprep.subr.bf16.mxu0 %v471
    %535 = vmatpush1.bf16.msra.mxu0 %v470
    %536 = vmatprep.subr.bf16.mxu0 %v473
    %537 = vmatpush1.bf16.msra.mxu0 %v472
    %538 = vmatprep.subr.bf16.mxu0 %v475
    %539 = vmatpush1.bf16.msra.mxu0 %v474
    %540 = vmatprep.subr.bf16.mxu0 %v477
    %541 = vmatpush1.bf16.msra.mxu0 %v476
    %542 = vmatprep.subr.bf16.mxu0 %v479
    %543 = vmatpush1.bf16.msra.mxu0 %v478
    %544 = vmatprep.subr.bf16.mxu0 %v481
    %545 = vmatpush1.bf16.msra.mxu0 %v480
    %546 = vmatprep.subr.bf16.mxu0 %v483
    %547 = vmatpush1.bf16.msra.mxu0 %v482
    %548 = vmatprep.subr.bf16.mxu0 %v485
    %549 = vmatpush1.bf16.msra.mxu0 %v484
    %550 = vmatprep.subr.bf16.mxu0 %v487
    %551 = vmatpush1.bf16.msra.mxu0 %v486
    %552 = vmatprep.subr.bf16.mxu0 %v489
    %553 = vmatpush1.bf16.msra.mxu0 %v488
    %554 = vmatprep.subr.bf16.mxu0 %v491
    %555 = vmatpush1.bf16.msra.mxu0 %v490
    %556 = vmatprep.subr.bf16.mxu0 %v493
    %557 = vmatpush1.bf16.msra.mxu0 %v492
    %558 = vmatprep.subr.bf16.mxu0 %v495
    %559 = vmatpush1.bf16.msra.mxu0 %v494
    %560 = vmatprep.subr.bf16.mxu0 %v497
    %561 = vmatpush1.bf16.msra.mxu0 %v496
    %562 = vmatprep.subr.bf16.mxu0 %v499
    %563 = vmatpush1.bf16.msra.mxu0 %v498
    %564 = vmatprep.mubr.bf16.mxu0 %v360
    %565 = vmatmul.mubr.bf16.gmra.mrb[0].mxu0 %v359
    %v566 = vpop.f32.mrb[0].mxu0
    %v567 = vadd.f32 %v365, %v566
    %v568 = vpop.f32.mrb[0].mxu0
    %v569 = vadd.f32 %v369, %v568
    %v570 = vpop.f32.mrb[0].mxu0
    %v571 = vpop.f32.mrb[0].mxu0
    %572 = vdwg.mxu0
    %vm573 = vcmp.ge.f32.partialorder %v567, 0.0
    %vm574 = vcmp.ge.f32.partialorder %v569, 0.0
    %v575 = vmul.f32 %v567, 0.2
    %v576 = vmul.f32 %v569, 0.2
    %v577 = vsel %vm573, %v567, %v575
    %v578 = vsel %vm574, %v569, %v576
    %v579 = vld [vmem:[%s5] sm:$0x3]
    %v580 = vunpack.c.l.bf16 %v579
    %v581 = vld [vmem:[#allocation2] sm:$0x1]
    %v583 = vlaneseq
    %v584 = vshrl.u32 %v583, 7
    %v585 = vsub.s32 0, %v584
    %v586 = vrot.slane %v580, %v585
    %v587 = vlaneseq
    %v588 = vshrl.u32 %v587, 7
    %v589 = vsub.s32 2, %v588
    %v590 = vrot.slane %v580, %v589
    %v593 = vlaneseq
    %v594 = vshrl.u32 %v593, 7
    %v595 = vsub.s32 0, %v594
    %v596 = vrot.slane %v586, %v595
    %v597 = vlaneseq
    %v598 = vshrl.u32 %v597, 7
    %v599 = vsub.s32 0, %v598
    %v600 = vrot.slane %v590, %v599
    %v601 = vmul.f32 %v577, %v596
    %v602 = vmul.f32 %v578, %v600
    %v603 = vadd.f32 %v601, %v602
    %604 = vadd.xlane.f32.xlu0 %v603
    %v605 = vpop.xlane.xlu0 %604
    %v607 = vlaneseq
    %v608 = vshrl.u32 %v607, 7
    %v609 = vsub.s32 0, %v608
    %v610 = vrot.slane %v581, %v609
    %v612 = vadd.f32 %v605, %v610
    %vm613 = vcmask 7168
    %614 = vst.msk [vmem:[%s7] sm:$0xff] %vm613, %v612
    // Predicated region
    $region42: #{tpu_custom_call.1} parent=1 // pred_check
      _
    $region43: #{tpu_custom_call.1} parent=1 // pred_check_branch
      %616 = sbr.rel (0) target = $region45
    $region44: #{tpu_custom_call.1} parent=1 // pred_region
      _
    $region45: #{tpu_custom_call.1} parent=1 // pred_fallthru
      _
    // Predicated region
    $region46: #{tpu_custom_call.1} parent=1 // pred_check
      _
    $region47: #{tpu_custom_call.1} parent=1 // pred_check_branch
      %618 = sbr.rel (0) target = $region49
    $region48: #{tpu_custom_call.1} parent=1 // pred_region
      _
    $region49: #{tpu_custom_call.1} parent=1 // pred_fallthru
      _
    %619 = vsyncpa [#allocation4], 1
    %620 = vsyncpa [#allocation6], 1

</llo_original>
